<compile_context>
chip_gen: v5e
topology: v5e:2x2
jax: 0.10.0
libtpu: 0.0.40
codegen_flags: <defaults>
</compile_context>

<pallas_src>
import jax
import jax.numpy as jnp
from jax.experimental import pallas as pl
from jax.experimental.pallas import tpu as pltpu


def film_kernel(labels_ref, emb_ref, w_ref, b_ref, out_ref, pooled_ref):
    # labels_ref : SMEM (B, L) int32
    # emb_ref    : VMEM (V, D) f32
    # w_ref      : VMEM (D, G+Bz) f32   fused gamma|beta head weight
    # b_ref      : VMEM (1, G+Bz) f32   fused gamma|beta head bias
    # out_ref    : VMEM (B, G+Bz) f32   fused relu(gamma)|relu(beta)
    # pooled_ref : VMEM (B, D) f32      scratch for the mean-pooled embeddings
    B, L = labels_ref.shape
    inv_l = jnp.float32(1.0 / L)

    # Embedding gather + mean over the label axis: scalar-indexed row loads
    # accumulated on the VPU (B, L are tiny & static -> fully unrolled).
    for b in range(B):
        acc = emb_ref[pl.ds(labels_ref[b, 0], 1), :]          # (1, D)
        for l in range(1, L):
            acc = acc + emb_ref[pl.ds(labels_ref[b, l], 1), :]
        pooled_ref[pl.ds(b, 1), :] = acc * inv_l

    # Dropout(p=0.05) is identity in eval mode.

    # Fused gamma|beta heads: one lane-dense (B, 128) MXU matmul + bias + ReLU,
    # one unmasked 128-wide output store.
    fused = jnp.dot(pooled_ref[...], w_ref[...],
                    preferred_element_type=jnp.float32)
    out_ref[...] = jnp.maximum(fused + b_ref[...], 0.0)


def film_forward(class_labels, emb_table, w_gamma, b_gamma, w_beta, b_beta):
    B = class_labels.shape[0]
    D = emb_table.shape[1]
    G = w_gamma.shape[1]
    Bz = w_beta.shape[1]

    # Fuse the two heads so the kernel sees a single (D, G+Bz) weight / bias.
    w_fused = jnp.concatenate([w_gamma, w_beta], axis=1)      # (D, G+Bz)
    b_fused = jnp.concatenate([b_gamma, b_beta], axis=1)      # (1, G+Bz)

    vmem = pl.BlockSpec(memory_space=pltpu.MemorySpace.VMEM)
    smem = pl.BlockSpec(memory_space=pltpu.MemorySpace.SMEM)

    out = pl.pallas_call(
        film_kernel,
        out_shape=jax.ShapeDtypeStruct((B, G + Bz), jnp.float32),
        in_specs=[smem, vmem, vmem, vmem],
        out_specs=vmem,
        scratch_shapes=[pltpu.VMEM((B, D), jnp.float32)],
    )(class_labels, emb_table, w_fused, b_fused)

    return out[:, :G], out[:, G:]


if __name__ == "__main__":
    key = jax.random.PRNGKey(0)
    k_emb, k_wg, k_bg, k_wb, k_bb, k_lbl = jax.random.split(key, 6)

    V, D = 256, 128          # nn.Embedding(256, 128)
    gamma_size, beta_size = 64, 64
    B, L = 2, 8              # batch of 2, sequence of 8 class labels

    # Deterministic synthetic parameters (shapes match the torch module,
    # weights pre-transposed so y = x @ W + b).
    emb_table = jax.random.normal(k_emb, (V, D), dtype=jnp.float32) * 0.02
    w_gamma = jax.random.normal(k_wg, (D, gamma_size), dtype=jnp.float32) * 0.05
    b_gamma = jax.random.normal(k_bg, (1, gamma_size), dtype=jnp.float32) * 0.05
    w_beta = jax.random.normal(k_wb, (D, beta_size), dtype=jnp.float32) * 0.05
    b_beta = jax.random.normal(k_bb, (1, beta_size), dtype=jnp.float32) * 0.05

    class_labels = jax.random.randint(k_lbl, (B, L), 0, V, dtype=jnp.int32)

    gamma, beta = film_forward(class_labels, emb_table,
                               w_gamma, b_gamma, w_beta, b_beta)
    jax.block_until_ready((gamma, beta))

    # Pure-JAX reference (eval-mode dropout == identity).
    pooled_ref = jnp.mean(emb_table[class_labels], axis=1)
    gamma_ref = jnp.maximum(pooled_ref @ w_gamma + b_gamma, 0.0)
    beta_ref = jnp.maximum(pooled_ref @ w_beta + b_beta, 0.0)
    assert jnp.allclose(gamma, gamma_ref, atol=1e-5)
    assert jnp.allclose(beta, beta_ref, atol=1e-5)

    print("KERNEL_OK")
</pallas_src>

<mosaic_0001>
module attributes {stable_mosaic.version = 11 : i64} {
  func.func @film_kernel(%arg0: memref<2x8xi32, #tpu.memory_space<smem>>, %arg1: memref<256x128xf32, #tpu.memory_space<vmem>>, %arg2: memref<128x128xf32, #tpu.memory_space<vmem>>, %arg3: memref<1x128xf32, #tpu.memory_space<vmem>>, %arg4: memref<2x128xf32, #tpu.memory_space<vmem>>, %arg5: memref<2x128xf32, #tpu.memory_space<vmem>>) attributes {dimension_semantics = [], scalar_prefetch = 0 : i64, scratch_operands = 1 : i64, tpu.core_type = #tpu.core_type<tc>} {
    %c0 = arith.constant 0 : index
    %c0_0 = arith.constant 0 : index
    %0 = memref.load %arg0[%c0, %c0_0] : memref<2x8xi32, #tpu.memory_space<smem>>
    %1 = arith.index_cast %0 : i32 to index
    %c0_1 = arith.constant 0 : index
    %2 = vector.load %arg1[%1, %c0_1] : memref<256x128xf32, #tpu.memory_space<vmem>>, vector<1x128xf32>
    %c0_2 = arith.constant 0 : index
    %c1 = arith.constant 1 : index
    %3 = memref.load %arg0[%c0_2, %c1] : memref<2x8xi32, #tpu.memory_space<smem>>
    %4 = arith.index_cast %3 : i32 to index
    %c0_3 = arith.constant 0 : index
    %5 = vector.load %arg1[%4, %c0_3] : memref<256x128xf32, #tpu.memory_space<vmem>>, vector<1x128xf32>
    %6 = arith.addf %2, %5 : vector<1x128xf32>
    %c0_4 = arith.constant 0 : index
    %c2 = arith.constant 2 : index
    %7 = memref.load %arg0[%c0_4, %c2] : memref<2x8xi32, #tpu.memory_space<smem>>
    %8 = arith.index_cast %7 : i32 to index
    %c0_5 = arith.constant 0 : index
    %9 = vector.load %arg1[%8, %c0_5] : memref<256x128xf32, #tpu.memory_space<vmem>>, vector<1x128xf32>
    %10 = arith.addf %6, %9 : vector<1x128xf32>
    %c0_6 = arith.constant 0 : index
    %c3 = arith.constant 3 : index
    %11 = memref.load %arg0[%c0_6, %c3] : memref<2x8xi32, #tpu.memory_space<smem>>
    %12 = arith.index_cast %11 : i32 to index
    %c0_7 = arith.constant 0 : index
    %13 = vector.load %arg1[%12, %c0_7] : memref<256x128xf32, #tpu.memory_space<vmem>>, vector<1x128xf32>
    %14 = arith.addf %10, %13 : vector<1x128xf32>
    %c0_8 = arith.constant 0 : index
    %c4 = arith.constant 4 : index
    %15 = memref.load %arg0[%c0_8, %c4] : memref<2x8xi32, #tpu.memory_space<smem>>
    %16 = arith.index_cast %15 : i32 to index
    %c0_9 = arith.constant 0 : index
    %17 = vector.load %arg1[%16, %c0_9] : memref<256x128xf32, #tpu.memory_space<vmem>>, vector<1x128xf32>
    %18 = arith.addf %14, %17 : vector<1x128xf32>
    %c0_10 = arith.constant 0 : index
    %c5 = arith.constant 5 : index
    %19 = memref.load %arg0[%c0_10, %c5] : memref<2x8xi32, #tpu.memory_space<smem>>
    %20 = arith.index_cast %19 : i32 to index
    %c0_11 = arith.constant 0 : index
    %21 = vector.load %arg1[%20, %c0_11] : memref<256x128xf32, #tpu.memory_space<vmem>>, vector<1x128xf32>
    %22 = arith.addf %18, %21 : vector<1x128xf32>
    %c0_12 = arith.constant 0 : index
    %c6 = arith.constant 6 : index
    %23 = memref.load %arg0[%c0_12, %c6] : memref<2x8xi32, #tpu.memory_space<smem>>
    %24 = arith.index_cast %23 : i32 to index
    %c0_13 = arith.constant 0 : index
    %25 = vector.load %arg1[%24, %c0_13] : memref<256x128xf32, #tpu.memory_space<vmem>>, vector<1x128xf32>
    %26 = arith.addf %22, %25 : vector<1x128xf32>
    %c0_14 = arith.constant 0 : index
    %c7 = arith.constant 7 : index
    %27 = memref.load %arg0[%c0_14, %c7] : memref<2x8xi32, #tpu.memory_space<smem>>
    %28 = arith.index_cast %27 : i32 to index
    %c0_15 = arith.constant 0 : index
    %29 = vector.load %arg1[%28, %c0_15] : memref<256x128xf32, #tpu.memory_space<vmem>>, vector<1x128xf32>
    %30 = arith.addf %26, %29 : vector<1x128xf32>
    %cst = arith.constant 1.250000e-01 : f32
    %31 = vector.broadcast %cst : f32 to vector<1x128xf32>
    %32 = arith.mulf %30, %31 : vector<1x128xf32>
    %c0_16 = arith.constant 0 : index
    %c0_17 = arith.constant 0 : index
    %33 = vector.load %arg5[%c0_16, %c0_17] : memref<2x128xf32, #tpu.memory_space<vmem>>, vector<1x128xf32>
    tpu.vector_store %arg5[%c0_16, %c0_17], %32 {strides = array<i32>} : memref<2x128xf32, #tpu.memory_space<vmem>>, vector<1x128xf32>,
    %c1_18 = arith.constant 1 : index
    %c0_19 = arith.constant 0 : index
    %34 = memref.load %arg0[%c1_18, %c0_19] : memref<2x8xi32, #tpu.memory_space<smem>>
    %35 = arith.index_cast %34 : i32 to index
    %c0_20 = arith.constant 0 : index
    %36 = vector.load %arg1[%35, %c0_20] : memref<256x128xf32, #tpu.memory_space<vmem>>, vector<1x128xf32>
    %c1_21 = arith.constant 1 : index
    %c1_22 = arith.constant 1 : index
    %37 = memref.load %arg0[%c1_21, %c1_22] : memref<2x8xi32, #tpu.memory_space<smem>>
    %38 = arith.index_cast %37 : i32 to index
    %c0_23 = arith.constant 0 : index
    %39 = vector.load %arg1[%38, %c0_23] : memref<256x128xf32, #tpu.memory_space<vmem>>, vector<1x128xf32>
    %40 = arith.addf %36, %39 : vector<1x128xf32>
    %c1_24 = arith.constant 1 : index
    %c2_25 = arith.constant 2 : index
    %41 = memref.load %arg0[%c1_24, %c2_25] : memref<2x8xi32, #tpu.memory_space<smem>>
    %42 = arith.index_cast %41 : i32 to index
    %c0_26 = arith.constant 0 : index
    %43 = vector.load %arg1[%42, %c0_26] : memref<256x128xf32, #tpu.memory_space<vmem>>, vector<1x128xf32>
    %44 = arith.addf %40, %43 : vector<1x128xf32>
    %c1_27 = arith.constant 1 : index
    %c3_28 = arith.constant 3 : index
    %45 = memref.load %arg0[%c1_27, %c3_28] : memref<2x8xi32, #tpu.memory_space<smem>>
    %46 = arith.index_cast %45 : i32 to index
    %c0_29 = arith.constant 0 : index
    %47 = vector.load %arg1[%46, %c0_29] : memref<256x128xf32, #tpu.memory_space<vmem>>, vector<1x128xf32>
    %48 = arith.addf %44, %47 : vector<1x128xf32>
    %c1_30 = arith.constant 1 : index
    %c4_31 = arith.constant 4 : index
    %49 = memref.load %arg0[%c1_30, %c4_31] : memref<2x8xi32, #tpu.memory_space<smem>>
    %50 = arith.index_cast %49 : i32 to index
    %c0_32 = arith.constant 0 : index
    %51 = vector.load %arg1[%50, %c0_32] : memref<256x128xf32, #tpu.memory_space<vmem>>, vector<1x128xf32>
    %52 = arith.addf %48, %51 : vector<1x128xf32>
    %c1_33 = arith.constant 1 : index
    %c5_34 = arith.constant 5 : index
    %53 = memref.load %arg0[%c1_33, %c5_34] : memref<2x8xi32, #tpu.memory_space<smem>>
    %54 = arith.index_cast %53 : i32 to index
    %c0_35 = arith.constant 0 : index
    %55 = vector.load %arg1[%54, %c0_35] : memref<256x128xf32, #tpu.memory_space<vmem>>, vector<1x128xf32>
    %56 = arith.addf %52, %55 : vector<1x128xf32>
    %c1_36 = arith.constant 1 : index
    %c6_37 = arith.constant 6 : index
    %57 = memref.load %arg0[%c1_36, %c6_37] : memref<2x8xi32, #tpu.memory_space<smem>>
    %58 = arith.index_cast %57 : i32 to index
    %c0_38 = arith.constant 0 : index
    %59 = vector.load %arg1[%58, %c0_38] : memref<256x128xf32, #tpu.memory_space<vmem>>, vector<1x128xf32>
    %60 = arith.addf %56, %59 : vector<1x128xf32>
    %c1_39 = arith.constant 1 : index
    %c7_40 = arith.constant 7 : index
    %61 = memref.load %arg0[%c1_39, %c7_40] : memref<2x8xi32, #tpu.memory_space<smem>>
    %62 = arith.index_cast %61 : i32 to index
    %c0_41 = arith.constant 0 : index
    %63 = vector.load %arg1[%62, %c0_41] : memref<256x128xf32, #tpu.memory_space<vmem>>, vector<1x128xf32>
    %64 = arith.addf %60, %63 : vector<1x128xf32>
    %cst_42 = arith.constant 1.250000e-01 : f32
    %65 = vector.broadcast %cst_42 : f32 to vector<1x128xf32>
    %66 = arith.mulf %64, %65 : vector<1x128xf32>
    %c1_43 = arith.constant 1 : index
    %c0_44 = arith.constant 0 : index
    %67 = vector.load %arg5[%c1_43, %c0_44] : memref<2x128xf32, #tpu.memory_space<vmem>>, vector<1x128xf32>
    tpu.vector_store %arg5[%c1_43, %c0_44], %66 {strides = array<i32>} : memref<2x128xf32, #tpu.memory_space<vmem>>, vector<1x128xf32>,
    %c0_45 = arith.constant 0 : index
    %c0_46 = arith.constant 0 : index
    %68 = vector.load %arg5[%c0_45, %c0_46] : memref<2x128xf32, #tpu.memory_space<vmem>>, vector<2x128xf32>
    %c0_47 = arith.constant 0 : index
    %c0_48 = arith.constant 0 : index
    %69 = vector.load %arg2[%c0_47, %c0_48] : memref<128x128xf32, #tpu.memory_space<vmem>>, vector<128x128xf32>
    %cst_49 = arith.constant dense<0.000000e+00> : vector<2x128xf32>
    %70 = tpu.matmul %68, %69, %cst_49 {dimension_numbers = #tpu.dot_dimension_numbers<[1], [0], [0], [1], [0, 0, 1, 1], [], []>} : vector<2x128xf32>, vector<128x128xf32>, vector<2x128xf32> -> vector<2x128xf32>
    %c0_50 = arith.constant 0 : index
    %c0_51 = arith.constant 0 : index
    %71 = vector.load %arg3[%c0_50, %c0_51] : memref<1x128xf32, #tpu.memory_space<vmem>>, vector<1x128xf32>
    %72 = vector.broadcast %71 : vector<1x128xf32> to vector<2x128xf32>
    %73 = arith.addf %70, %72 : vector<2x128xf32>
    %cst_52 = arith.constant 0.000000e+00 : f32
    %74 = vector.broadcast %cst_52 : f32 to vector<2x128xf32>
    %75 = arith.maximumf %73, %74 : vector<2x128xf32>
    %c0_53 = arith.constant 0 : index
    %c0_54 = arith.constant 0 : index
    %76 = vector.load %arg4[%c0_53, %c0_54] : memref<2x128xf32, #tpu.memory_space<vmem>>, vector<2x128xf32>
    tpu.vector_store %arg4[%c0_53, %c0_54], %75 {strides = array<i32>} : memref<2x128xf32, #tpu.memory_space<vmem>>, vector<2x128xf32>,
    return
  }
}

</mosaic_0001>

<llo_original>
// kernel: tpu_custom_call.1
$region0: #{tpu_custom_call.1}
  #allocation0 [shape = 'u32[]', space=smem, size = 0x4, offset = 0x4, fixed_abs, tag = 'smem constant byte address 0x4 - core index']
  #allocation1 [shape = 'u32[72,128]{1,0:T(1,128)}', space=vmem, size = 0x9000, scoped, tag = 'internal scratch']
  #allocation2 [shape = 'f32[2,128]{1,0:T(2,128)}', space=vmem, size = 0x400, scoped, tag = 'scratch operand']
  %s0 = inlined_call_operand.hbm [shape: s32[2,8], index: 0, kind: input, shape index: {}]
  %s1 = inlined_call_operand.hbm [shape: f32[256,128], index: 1, kind: input, shape index: {}]
  %s2 = inlined_call_operand.hbm [shape: f32[128,128], index: 2, kind: input, shape index: {}]
  %s3 = inlined_call_operand.vmem [shape: f32[1,128], index: 3, kind: input, shape index: {}]
  %s4 = inlined_call_operand.hbm [shape: f32[2,128], index: 4, kind: output, shape index: {}]
  %s5 = sld [smem:[#allocation0]]
  $region38: #{tpu_custom_call.1} parent=0
    _
  %s7 = ssub.s32 1, %s5
  %s8 = scalar_select 0, %s7, %s5
  $region1: #{tpu_custom_call.1} parent=0
    #allocation3 [shape = 'u8[1024]{0}', space=smem, size = 0x400, scoped, tag = 'input window, operand 0, single buffered']
    #allocation4 [shape = 's32[1]{0}', space=sflag, size = 0x4, scoped, tag = 'scoped memory for tpu_custom_call.1']
    #allocation5 [shape = 's32[1]{0}', space=sflag, size = 0x4, scoped, tag = 'scoped memory for tpu_custom_call.1']
    #allocation6 [shape = 's32[1]{0}', space=sflag, size = 0x4, scoped, tag = 'scoped memory for tpu_custom_call.1']
    #allocation7 [shape = 'u8[131072]{0}', space=vmem, size = 0x20000, scoped, tag = 'input window, operand 1, single buffered']
    #allocation8 [shape = 'u8[65536]{0}', space=vmem, size = 0x10000, scoped, tag = 'input window, operand 2, single buffered']
    #allocation9 [shape = 's32[1]{0}', space=sflag, size = 0x4, scoped, tag = 'scoped memory for tpu_custom_call.1']
    #allocation10 [shape = 'u8[1024]{0}', space=vmem, size = 0x400, scoped, tag = 'output window, operand 0, single buffered']
    %9 = vsyncpa [#allocation6], 0
    %10 = vsyncpa [#allocation4], 0
    %11 = vsyncpa [#allocation9], 0
    %12 = vsyncpa [#allocation5], 0
    // Predicated region
    $region2: #{tpu_custom_call.1} parent=1 // pred_check
      _
    $region3: #{tpu_custom_call.1} parent=1 // pred_check_branch
      %14 = sbr.rel (0) target = $region5
    $region4: #{tpu_custom_call.1} parent=1 // pred_region
      %16 = vsyncadd [#allocation6], 0
      %s18 = sshll.u32 %s0, 4
      %s19 = int_to_ptr.hbm [resolvable:$true] %s18
      %21 = dma.hbm_to_smem %s19, 32, [#allocation3], [#allocation6]
    $region5: #{tpu_custom_call.1} parent=1 // pred_fallthru
      _
    // Predicated region
    $region6: #{tpu_custom_call.1} parent=1 // pred_check
      _
    $region7: #{tpu_custom_call.1} parent=1 // pred_check_branch
      %23 = sbr.rel (0) target = $region9
    $region8: #{tpu_custom_call.1} parent=1 // pred_region
      %25 = vsyncadd [#allocation4], 0
      %s26 = sshll.u32 %s1, 4
      %s27 = int_to_ptr.hbm [resolvable:$true] %s26
      %s28 = sshll.u32 [#allocation7], 4
      %s29 = int_to_ptr.vmem [resolvable:$true] %s28
      %34 = dma.hbm_to_vmem [thread:$0]  %s27, 4096, %s29, [#allocation4], 128, 128, 8
    $region9: #{tpu_custom_call.1} parent=1 // pred_fallthru
      _
    // Predicated region
    $region10: #{tpu_custom_call.1} parent=1 // pred_check
      _
    $region11: #{tpu_custom_call.1} parent=1 // pred_check_branch
      %36 = sbr.rel (0) target = $region13
    $region12: #{tpu_custom_call.1} parent=1 // pred_region
      %38 = vsyncadd [#allocation9], 0
      %s39 = sshll.u32 %s2, 4
      %s40 = int_to_ptr.hbm [resolvable:$true] %s39
      %s41 = sshll.u32 [#allocation8], 4
      %s42 = int_to_ptr.vmem [resolvable:$true] %s41
      %47 = dma.hbm_to_vmem [thread:$0]  %s40, 2048, %s42, [#allocation9], 128, 128, 8
    $region13: #{tpu_custom_call.1} parent=1 // pred_fallthru
      _
    // Predicated region
    $region14: #{tpu_custom_call.1} parent=1 // pred_check
      _
    $region15: #{tpu_custom_call.1} parent=1 // pred_check_branch
      %49 = sbr.rel (0) target = $region17
    $region16: #{tpu_custom_call.1} parent=1 // pred_region
      _
    $region17: #{tpu_custom_call.1} parent=1 // pred_fallthru
      _
    // Predicated region
    $region18: #{tpu_custom_call.1} parent=1 // pred_check
      _
    $region19: #{tpu_custom_call.1} parent=1 // pred_check_branch
      %51 = sbr.rel (0) target = $region21
    $region20: #{tpu_custom_call.1} parent=1 // pred_region
      %53 = dma.done [#allocation6], 32
    $region21: #{tpu_custom_call.1} parent=1 // pred_fallthru
      _
    // Predicated region
    $region22: #{tpu_custom_call.1} parent=1 // pred_check
      _
    $region23: #{tpu_custom_call.1} parent=1 // pred_check_branch
      %55 = sbr.rel (0) target = $region25
    $region24: #{tpu_custom_call.1} parent=1 // pred_region
      %57 = dma.done [#allocation4], 4096
    $region25: #{tpu_custom_call.1} parent=1 // pred_fallthru
      _
    // Predicated region
    $region26: #{tpu_custom_call.1} parent=1 // pred_check
      _
    $region27: #{tpu_custom_call.1} parent=1 // pred_check_branch
      %59 = sbr.rel (0) target = $region29
    $region28: #{tpu_custom_call.1} parent=1 // pred_region
      %61 = dma.done [#allocation9], 2048
    $region29: #{tpu_custom_call.1} parent=1 // pred_fallthru
      _
    %62 = sfence
    %s63 = sld [smem:[#allocation3]]
    %s64 = scalar_lea.vmem [#allocation7], %s63
    %v65 = vld [vmem:[%s64] sm:$0x1]
    %s66 = sld [smem:[#allocation3 + $0x1]]
    %s67 = scalar_lea.vmem [#allocation7], %s66
    %v68 = vld [vmem:[%s67] sm:$0x1]
    %v69 = vadd.f32 %v65, %v68
    %s70 = sld [smem:[#allocation3 + $0x2]]
    %s71 = scalar_lea.vmem [#allocation7], %s70
    %v72 = vld [vmem:[%s71] sm:$0x1]
    %v73 = vadd.f32 %v69, %v72
    %s74 = sld [smem:[#allocation3 + $0x3]]
    %s75 = scalar_lea.vmem [#allocation7], %s74
    %v76 = vld [vmem:[%s75] sm:$0x1]
    %v77 = vadd.f32 %v73, %v76
    %s78 = sld [smem:[#allocation3 + $0x4]]
    %s79 = scalar_lea.vmem [#allocation7], %s78
    %v80 = vld [vmem:[%s79] sm:$0x1]
    %v81 = vadd.f32 %v77, %v80
    %s82 = sld [smem:[#allocation3 + $0x5]]
    %s83 = scalar_lea.vmem [#allocation7], %s82
    %v84 = vld [vmem:[%s83] sm:$0x1]
    %v85 = vadd.f32 %v81, %v84
    %s86 = sld [smem:[#allocation3 + $0x6]]
    %s87 = scalar_lea.vmem [#allocation7], %s86
    %v88 = vld [vmem:[%s87] sm:$0x1]
    %v89 = vadd.f32 %v85, %v88
    %s90 = sld [smem:[#allocation3 + $0x7]]
    %s91 = scalar_lea.vmem [#allocation7], %s90
    %v92 = vld [vmem:[%s91] sm:$0x1]
    %v93 = vadd.f32 %v89, %v92
    %v94 = vmul.f32 %v93, 0.125
    %95 = vst [vmem:[#allocation2] sm:$0x1] %v94
    %s96 = sld [smem:[#allocation3 + $0x80]]
    %s97 = scalar_lea.vmem [#allocation7], %s96
    %v98 = vld [vmem:[%s97] sm:$0x1]
    %s99 = sld [smem:[#allocation3 + $0x81]]
    %s100 = scalar_lea.vmem [#allocation7], %s99
    %v101 = vld [vmem:[%s100] sm:$0x1]
    %v102 = vadd.f32 %v98, %v101
    %s103 = sld [smem:[#allocation3 + $0x82]]
    %s104 = scalar_lea.vmem [#allocation7], %s103
    %v105 = vld [vmem:[%s104] sm:$0x1]
    %v106 = vadd.f32 %v102, %v105
    %s107 = sld [smem:[#allocation3 + $0x83]]
    %s108 = scalar_lea.vmem [#allocation7], %s107
    %v109 = vld [vmem:[%s108] sm:$0x1]
    %v110 = vadd.f32 %v106, %v109
    %s111 = sld [smem:[#allocation3 + $0x84]]
    %s112 = scalar_lea.vmem [#allocation7], %s111
    %v113 = vld [vmem:[%s112] sm:$0x1]
    %v114 = vadd.f32 %v110, %v113
    %s115 = sld [smem:[#allocation3 + $0x85]]
    %s116 = scalar_lea.vmem [#allocation7], %s115
    %v117 = vld [vmem:[%s116] sm:$0x1]
    %v118 = vadd.f32 %v114, %v117
    %s119 = sld [smem:[#allocation3 + $0x86]]
    %s120 = scalar_lea.vmem [#allocation7], %s119
    %v121 = vld [vmem:[%s120] sm:$0x1]
    %v122 = vadd.f32 %v118, %v121
    %s123 = sld [smem:[#allocation3 + $0x87]]
    %s124 = scalar_lea.vmem [#allocation7], %s123
    %v125 = vld [vmem:[%s124] sm:$0x1]
    %v126 = vadd.f32 %v122, %v125
    %v127 = vmul.f32 %v126, 0.125
    %128 = vst [vmem:[#allocation2 + $0x1] sm:$0x1] %v127
    %v129 = vld [vmem:[#allocation2] sm:$0x3]
    %v130 = vld [vmem:[#allocation8] sm:$0xff]
    %v131 = vld [vmem:[#allocation8 + $0x8] sm:$0xff]
    %v132 = vld [vmem:[#allocation8 + $0x10] sm:$0xff]
    %v133 = vld [vmem:[#allocation8 + $0x18] sm:$0xff]
    %v134 = vld [vmem:[#allocation8 + $0x20] sm:$0xff]
    %v135 = vld [vmem:[#allocation8 + $0x28] sm:$0xff]
    %v136 = vld [vmem:[#allocation8 + $0x30] sm:$0xff]
    %v137 = vld [vmem:[#allocation8 + $0x38] sm:$0xff]
    %v138 = vld [vmem:[#allocation8 + $0x40] sm:$0xff]
    %v139 = vld [vmem:[#allocation8 + $0x48] sm:$0xff]
    %v140 = vld [vmem:[#allocation8 + $0x50] sm:$0xff]
    %v141 = vld [vmem:[#allocation8 + $0x58] sm:$0xff]
    %v142 = vld [vmem:[#allocation8 + $0x60] sm:$0xff]
    %v143 = vld [vmem:[#allocation8 + $0x68] sm:$0xff]
    %v144 = vld [vmem:[#allocation8 + $0x70] sm:$0xff]
    %v145 = vld [vmem:[#allocation8 + $0x78] sm:$0xff]
    %v146 = vld [vmem:[%s3] sm:$0x1]
    %v148 = vperm.slane %v146, 0
    %150 = vmatpush.msra.mxu0 %v145
    %151 = vmatpush.msra.mxu0 %v144
    %152 = vmatpush.msra.mxu0 %v143
    %153 = vmatpush.msra.mxu0 %v142
    %154 = vmatpush.msra.mxu0 %v141
    %155 = vmatpush.msra.mxu0 %v140
    %156 = vmatpush.msra.mxu0 %v139
    %157 = vmatpush.msra.mxu0 %v138
    %158 = vmatpush.msra.mxu0 %v137
    %159 = vmatpush.msra.mxu0 %v136
    %160 = vmatpush.msra.mxu0 %v135
    %161 = vmatpush.msra.mxu0 %v134
    %162 = vmatpush.msra.mxu0 %v133
    %163 = vmatpush.msra.mxu0 %v132
    %164 = vmatpush.msra.mxu0 %v131
    %165 = vmatpush.msra.mxu0 %v130
    %166 = vmatmul.f32.gmra.mxu0 %v129
    %v167 = vpop.f32.mrf.mxu0
    %v168 = vadd.f32 %v148, %v167
    %169 = vdwg.mxu0
    %v170 = vmax.f32 %v168, 0.0
    %171 = vst [vmem:[#allocation10] sm:$0x3] %v170
    // Predicated region
    $region30: #{tpu_custom_call.1} parent=1 // pred_check
      _
    $region31: #{tpu_custom_call.1} parent=1 // pred_check_branch
      %173 = sbr.rel (0) target = $region33
    $region32: #{tpu_custom_call.1} parent=1 // pred_region
      %175 = vsyncadd [#allocation5], 0
      %s177 = sshll.u32 [#allocation10], 4
      %s178 = int_to_ptr.vmem [resolvable:$true] %s177
      %s179 = sshll.u32 %s4, 4
      %s180 = int_to_ptr.hbm [resolvable:$true] %s179
      %182 = dma.vmem_to_hbm [thread:$0]  %s178, 32, %s180, [#allocation5]
    $region33: #{tpu_custom_call.1} parent=1 // pred_fallthru
      _
    // Predicated region
    $region34: #{tpu_custom_call.1} parent=1 // pred_check
      _
    $region35: #{tpu_custom_call.1} parent=1 // pred_check_branch
      %184 = sbr.rel (0) target = $region37
    $region36: #{tpu_custom_call.1} parent=1 // pred_region
      %186 = dma.done [#allocation5], 32
    $region37: #{tpu_custom_call.1} parent=1 // pred_fallthru
      _
    %187 = vsyncpa [#allocation4], 1
    %188 = vsyncpa [#allocation9], 1
    %189 = vsyncpa [#allocation5], 1
    %190 = vsyncpa [#allocation6], 1

</llo_original>
